<compile_context>
chip_gen: v5e
topology: v5e:2x2
jax: 0.10.0
libtpu: 0.0.40
codegen_flags: <defaults>
</compile_context>

<pallas_src>
import functools

import jax
import jax.numpy as jnp
from jax.experimental import pallas as pl
from jax.experimental.pallas import tpu as pltpu


_MAX_BATCH_BLOCK = 8            # cap on the in-kernel unrolled batch loop
_TARGET_STEP_BYTES = 4 << 20    # ~4 MiB of HBM traffic per grid step
_MIN_GRID_STEPS = 4             # keep the pipeline busy (>=2 steps/TC on v7x)
_SMALL_PROBLEM_BYTES = 1 << 20  # below this, fused XLA einsum beats pallas_call


def _conv1x1_kernel(w_ref, x_ref, o_ref, *, bn):
    # w_ref: (Cout, Cin)  -- resident across the whole grid (constant index map)
    # x_ref: (bn, Cin, tm), o_ref: (bn, Cout, tm); lane axis = tm (128-multiple)
    w = w_ref[...]
    for b in range(bn):  # static unroll: per-batch 2-D MXU matmul, dense stores
        o_ref[b] = jnp.dot(
            w, x_ref[b], preferred_element_type=jnp.float32
        ).astype(o_ref.dtype)


def _divisors_desc(n):
    return [d for d in range(n, 0, -1) if n % d == 0]


def _lane_tiles_desc(mp):
    # multiples of 128 that divide mp, largest first (mp is a 128-multiple)
    return [t for t in range(mp, 0, -128) if mp % t == 0]


def _vmem_budget_bytes():
    try:
        cap = pltpu.get_tpu_info().vmem_capacity_bytes
    except Exception:
        cap = 64 * 1024 * 1024  # conservative (v7x per-TC VMEM)
    # stay well inside physical VMEM; leave headroom for compiler scratch
    return min(cap // 2, 48 * 1024 * 1024)


def _pick_blocks(N, Cin, Cout, Mp, itemsize, vmem_budget):
    """Pick (bN, tm): ~_TARGET_STEP_BYTES per step, fits double-buffered VMEM,
    and keeps >= _MIN_GRID_STEPS grid steps whenever the shape allows it."""
    w_bytes = Cout * Cin * itemsize
    per_nm = (Cin + Cout) * itemsize          # bytes per (batch elem, lane)
    fit_budget = int(0.75 * vmem_budget)

    def fits(bn, tm):
        # double-buffered x + out blocks, plus (double-buffered) resident weight
        return 2 * bn * tm * per_nm + 2 * w_bytes <= fit_budget

    tiles = _lane_tiles_desc(Mp)
    tm = next((t for t in tiles if fits(1, t)), tiles[-1])

    spatial_steps = Mp // tm
    max_steps = N * spatial_steps
    required_steps = min(_MIN_GRID_STEPS, max_steps)

    bn = 1
    for cand in _divisors_desc(N):
        if cand > _MAX_BATCH_BLOCK:
            continue
        if not fits(cand, tm):
            continue
        if cand > 1 and cand * tm * per_nm > _TARGET_STEP_BYTES:
            continue
        if (N // cand) * spatial_steps < required_steps:
            continue
        bn = cand
        break
    return bn, tm


def conv1x1_pallas(x_ncm, w_mat):
    """x_ncm: (N, Cin, M) with M = H*W; w_mat: (Cout, Cin).

    Returns (N, Cout, M), i.e. per-batch W @ X (a 1x1 conv in NCHW layout).
    """
    N, Cin, M = x_ncm.shape
    Cout, Cin2 = w_mat.shape
    assert Cin == Cin2

    itemsize = jnp.dtype(x_ncm.dtype).itemsize

    # Pad the spatial axis to a lane multiple -> unmasked full-width stores.
    Mp = ((M + 127) // 128) * 128
    if Mp != M:
        x_ncm = jnp.pad(x_ncm, ((0, 0), (0, 0), (0, Mp - M)))

    vmem_budget = _vmem_budget_bytes()
    bN, tm = _pick_blocks(N, Cin, Cout, Mp, itemsize, vmem_budget)
    grid = (N // bN, Mp // tm)  # batch leading; both axes parallel

    total_bytes = (N * Cin * Mp + N * Cout * Mp + Cout * Cin) * itemsize
    cost = pl.CostEstimate(
        flops=2 * N * Cout * Cin * Mp,
        transcendentals=0,
        bytes_accessed=total_bytes,
    )

    y = pl.pallas_call(
        functools.partial(_conv1x1_kernel, bn=bN),
        out_shape=jax.ShapeDtypeStruct((N, Cout, Mp), x_ncm.dtype),
        grid_spec=pltpu.PrefetchScalarGridSpec(
            num_scalar_prefetch=0,
            grid=grid,
            in_specs=[
                # tiny weight, resident across the whole grid
                pl.BlockSpec((Cout, Cin), lambda n, s: (0, 0)),
                # lane-dense, batch-blocked activation tile
                pl.BlockSpec((bN, Cin, tm), lambda n, s: (n, 0, s)),
            ],
            out_specs=pl.BlockSpec((bN, Cout, tm), lambda n, s: (n, 0, s)),
        ),
        compiler_params=pltpu.CompilerParams(
            dimension_semantics=("parallel", "parallel"),
            vmem_limit_bytes=vmem_budget,
        ),
        cost_estimate=cost,
    )(w_mat, x_ncm)

    if Mp != M:
        y = y[:, :, :M]
    return y


class ExpendBlock:
    """JAX/Pallas port of Cifar10/models_lp/vgg.py::expend_block."""

    def __init__(self, in_channels, out_channels, key, force_pallas=False):
        self.in_channels = in_channels
        self.out_channels = out_channels
        self.force_pallas = force_pallas
        # nn.Conv2d(in, out, kernel_size=1, bias=False) default init:
        # U(-1/sqrt(fan_in), 1/sqrt(fan_in)), fan_in = in_channels * 1 * 1
        bound = 1.0 / float(in_channels) ** 0.5
        w_oihw = jax.random.uniform(
            key, (out_channels, in_channels, 1, 1),
            minval=-bound, maxval=bound, dtype=jnp.float32,
        )
        self.weight = w_oihw             # PyTorch layout (reference)
        self.w_mat = w_oihw[:, :, 0, 0]  # (Cout, Cin) for the W @ X formulation

    def __call__(self, x_nchw):
        if self.in_channels == self.out_channels:
            return x_nchw  # identity branch: conv is skipped entirely
        N, C, H, W = x_nchw.shape
        assert C == self.in_channels
        M = H * W
        itemsize = jnp.dtype(x_nchw.dtype).itemsize
        traffic = (N * C * M + N * self.out_channels * M) * itemsize
        x_flat = x_nchw.reshape(N, C, M)  # free: NCHW already has spatial last
        if traffic < _SMALL_PROBLEM_BYTES and not self.force_pallas:
            # tiny layer: launch/pipeline overhead dominates -> let XLA fuse it
            y_flat = jnp.einsum("oc,ncm->nom", self.w_mat, x_flat)
        else:
            y_flat = conv1x1_pallas(x_flat, self.w_mat)
        return y_flat.reshape(N, self.out_channels, H, W)


def _reference_conv1x1(x_nchw, w_oihw):
    # out[n,o,h,w] = sum_c w[o,c] * x[n,c,h,w]
    return jnp.einsum("oc,nchw->nohw", w_oihw[:, :, 0, 0], x_nchw)


if __name__ == "__main__":
    key = jax.random.PRNGKey(0)
    k_x, k_w, k_x2, k_w2 = jax.random.split(key, 4)

    # 1) small shape; force the Pallas path so the kernel is exercised even
    #    below the small-problem cutoff.
    N, C_in, H, W = 2, 4, 16, 16
    C_out = 8
    x = jax.random.normal(k_x, (N, C_in, H, W), dtype=jnp.float32)
    block = ExpendBlock(C_in, C_out, k_w, force_pallas=True)
    y = jax.block_until_ready(block(x))
    y_ref = _reference_conv1x1(x, block.weight)
    assert y.shape == (N, C_out, H, W)
    assert jnp.allclose(y, y_ref, atol=1e-5, rtol=1e-5)

    # 2) auto path (tiny problem -> einsum escape hatch) matches too
    block_auto = ExpendBlock(C_in, C_out, k_w)
    y_auto = jax.block_until_ready(block_auto(x))
    assert jnp.allclose(y_auto, y_ref, atol=1e-5, rtol=1e-5)

    # 3) identity branch (in_channels == out_channels): conv skipped
    block_id = ExpendBlock(C_in, C_in, k_w)
    assert jnp.array_equal(jax.block_until_ready(block_id(x)), x)

    # 4) non-128-multiple spatial extent exercises the pad/slice path
    x_odd = jax.random.normal(k_x2, (2, 4, 10, 10), dtype=jnp.float32)
    block_odd = ExpendBlock(4, 8, k_w, force_pallas=True)
    y_odd = jax.block_until_ready(block_odd(x_odd))
    assert jnp.allclose(
        y_odd, _reference_conv1x1(x_odd, block_odd.weight), atol=1e-5, rtol=1e-5
    )

    # 5) VGG-scale layer goes through the Pallas path naturally (batch-blocked)
    xv = jax.random.normal(k_x2, (8, 64, 32, 32), dtype=jnp.float32)
    block_vgg = ExpendBlock(64, 128, k_w2)
    yv = jax.block_until_ready(block_vgg(xv))
    assert jnp.allclose(
        yv, _reference_conv1x1(xv, block_vgg.weight), atol=1e-4, rtol=1e-4
    )

    print("KERNEL_OK")
</pallas_src>

<mosaic_0001>
module attributes {stable_mosaic.version = 11 : i64} {
  func.func @_conv1x1_kernel(%arg0: i32, %arg1: i32, %arg2: memref<8x4xf32, #tpu.memory_space<vmem>>, %arg3: memref<1x4x256xf32, #tpu.memory_space<vmem>>, %arg4: memref<1x8x256xf32, #tpu.memory_space<vmem>>) attributes {dimension_semantics = [#tpu.dimension_semantics<parallel>, #tpu.dimension_semantics<parallel>], iteration_bounds = array<i64: 2, 1>, scalar_prefetch = 0 : i64, scratch_operands = 0 : i64, tpu.core_type = #tpu.core_type<tc>, window_params = [{pipeline_mode = #tpu.pipeline_mode<synchronous>, transform_indices = @transform_0, window_bounds = array<i64: 8, 4>}, {transform_indices = @transform_1, window_bounds = array<i64: 1, 4, 256>}, {transform_indices = @transform_2, window_bounds = array<i64: 1, 8, 256>}]} {
    %c0 = arith.constant 0 : index
    %c0_0 = arith.constant 0 : index
    %0 = vector.load %arg2[%c0, %c0_0] : memref<8x4xf32, #tpu.memory_space<vmem>>, vector<8x4xf32>
    %c0_1 = arith.constant 0 : index
    %c0_2 = arith.constant 0 : index
    %c0_3 = arith.constant 0 : index
    %1 = vector.load %arg3[%c0_1, %c0_2, %c0_3] : memref<1x4x256xf32, #tpu.memory_space<vmem>>, vector<1x4x256xf32>
    %2 = vector.shape_cast %1 : vector<1x4x256xf32> to vector<4x256xf32>
    %cst = arith.constant dense<0.000000e+00> : vector<8x256xf32>
    %3 = tpu.matmul %0, %2, %cst {dimension_numbers = #tpu.dot_dimension_numbers<[1], [0], [0], [1], [0, 0, 1, 1], [], []>} : vector<8x4xf32>, vector<4x256xf32>, vector<8x256xf32> -> vector<8x256xf32>
    %c0_4 = arith.constant 0 : index
    %c0_5 = arith.constant 0 : index
    %c0_6 = arith.constant 0 : index
    %4 = vector.load %arg4[%c0_4, %c0_5, %c0_6] : memref<1x8x256xf32, #tpu.memory_space<vmem>>, vector<1x8x256xf32>
    %5 = vector.shape_cast %4 : vector<1x8x256xf32> to vector<8x256xf32>
    %6 = vector.shape_cast %3 : vector<8x256xf32> to vector<1x8x256xf32>
    tpu.vector_store %arg4[%c0_4, %c0_5, %c0_6], %6 {strides = array<i32>} : memref<1x8x256xf32, #tpu.memory_space<vmem>>, vector<1x8x256xf32>,
    return
  }
  func.func @transform_0(%arg0: i32, %arg1: i32) -> (i32, i32) {
    %c0_i32 = arith.constant 0 : i32
    %c0_i32_0 = arith.constant 0 : i32
    %c0_i32_1 = arith.constant 0 : i32
    return %c0_i32, %c0_i32_0 : i32, i32
  }
  func.func @transform_1(%arg0: i32, %arg1: i32) -> (i32, i32, i32) {
    %c0_i32 = arith.constant 0 : i32
    %c0_i32_0 = arith.constant 0 : i32
    return %arg0, %c0_i32, %arg1 : i32, i32, i32
  }
  func.func @transform_2(%arg0: i32, %arg1: i32) -> (i32, i32, i32) {
    %c0_i32 = arith.constant 0 : i32
    %c0_i32_0 = arith.constant 0 : i32
    return %arg0, %c0_i32, %arg1 : i32, i32, i32
  }
}

</mosaic_0001>

<llo_original>
// kernel: tpu_custom_call.1
$region0: #{tpu_custom_call.1}
  #allocation0 [shape = 'u32[]', space=smem, size = 0x4, offset = 0x4, fixed_abs, tag = 'smem constant byte address 0x4 - core index']
  #allocation1 [shape = 'u32[72,128]{1,0:T(1,128)}', space=vmem, size = 0x9000, scoped, tag = 'internal scratch']
  %s0 = inlined_call_operand.vmem [shape: f32[8,4], index: 0, kind: input, shape index: {}]
  %s1 = inlined_call_operand.hbm [shape: f32[2,4,256], index: 1, kind: input, shape index: {}]
  %s2 = inlined_call_operand.hbm [shape: f32[2,8,256], index: 2, kind: output, shape index: {}]
  %s3 = sld [smem:[#allocation0]]
  $region45: #{tpu_custom_call.1} parent=0
    _
  %s5 = ssub.s32 1, %s3
  %s6 = scalar_select 0, %s5, %s3
  $region1: #{tpu_custom_call.1} parent=0
    #allocation2 [shape = 'u8[8192]{0}', space=vmem, size = 0x2000, scoped, tag = 'input window, operand 1']
    #allocation3 [shape = 's32[2]{0}', space=sflag, size = 0x8, scoped, tag = 'scoped memory for tpu_custom_call.1']
    #allocation4 [shape = 's32[2]{0}', space=sflag, size = 0x8, scoped, tag = 'scoped memory for tpu_custom_call.1']
    #allocation5 [shape = 'u8[16384]{0}', space=vmem, size = 0x4000, scoped, tag = 'output window, operand 0']
    %7 = vsyncpa [#allocation3], 0
    %s8 = scalar_lea.sflag [#allocation3], 1
    %9 = vsyncpa %s8, 0
    %10 = vsyncpa [#allocation4], 0
    %s11 = scalar_lea.sflag [#allocation4], 1
    %12 = vsyncpa %s11, 0
    loop: start=0, step=1, limit=4
    $region2: #{tpu_custom_call.1} parent=1 // loop_pre_header
      _
    $region3: #{tpu_custom_call.1} parent=1 // loop_header
      %s14 = sphi 0, %s18
      %p15 = scmp.ge.s32.totalorder %s14, 4
      %s21 = sphi 0, %s33
      %s22 = sphi 0, %s29
      %s23 = sphi 0, %s21
      %s24 = sphi 0, %s22
      %s25 = sphi 0, %s23
      %s26 = sphi 0, %s24
      %s34 = sphi 0, %s34
      %s36 = sphi 0, %s34
      %s37 = sphi 0, %s36
      %s51 = sphi 0, %s37
      %s59 = sphi 0, %s61
      %s62 = sphi 0, %s59
      %s63 = sphi 0, %s62
      %s79 = sphi 0, %s63
      %s87 = sphi 0, %s89
      %s90 = sphi 0, %s87
      %s91 = sphi 0, %s90
      %s107 = sphi 0, %s91
    $region4: #{tpu_custom_call.1} parent=1 // loop_header_branch
      %17 = sbr.rel (%p15) target = $region8
    $region5: #{tpu_custom_call.1} parent=1 // loop_body
      %s19 = ssub.s32 %s14, 1
      %s20 = ssub.s32 %s14, 2
      %s27 = sadd.s32 1, %s22
      %p28 = scmp.ge.s32.totalorder %s27, 1
      %s29 = scalar_select %p28, 0, %s27
      %s30 = sadd.s32 1, %s21
      %s31 = scalar_select %p28, %s30, %s21
      %p32 = scmp.ge.s32.totalorder %s31, 2
      %s33 = scalar_select %p32, 0, %s31
      %s35 = sadd.s32 %s34, 1
      %p38 = scmp.eq.s32.totalorder %s14, 1
      %p39 = scmp.ne.s32.totalorder %s34, %s36
      %p40 = scmp.eq.s32.totalorder %s14, 0
      %p41 = por %p39, %p40
      %p42 = scmp.ne.s32.totalorder %s34, %s36
      %p43 = scmp.eq.s32.totalorder %s19, 1
      %p44 = por %p42, %p43
      %p45 = scmp.ne.s32.totalorder %s36, %s37
      %p46 = scmp.eq.s32.totalorder %s19, 0
      %p47 = por %p45, %p46
      %p48 = scmp.ne.s32.totalorder %s36, %s37
      %p49 = scmp.eq.s32.totalorder %s20, 1
      %p50 = por %p48, %p49
      %p52 = scmp.ne.s32.totalorder %s37, %s51
      %p53 = scmp.eq.s32.totalorder %s20, 0
      %p54 = por %p52, %p53
      %s55 = ssub.s32 %s21, %s33
      %s56 = ssub.s32 %s22, %s29
      %s57 = sor.u32 %s55, %s56
      %p58 = scmp.eq.s32.totalorder %s57, 0
      %s60 = sadd.s32 %s59, 1
      %s61 = scalar_select %p58, %s59, %s60
      %p64 = pneg %p58
      %p65 = scmp.eq.s32.totalorder %s14, 1
      %p66 = por %p64, %p65
      %p67 = scmp.ne.s32.totalorder %s59, %s62
      %p68 = scmp.eq.s32.totalorder %s14, 0
      %p69 = por %p67, %p68
      %p70 = scmp.ne.s32.totalorder %s59, %s62
      %p71 = scmp.eq.s32.totalorder %s19, 1
      %p72 = por %p70, %p71
      %p73 = scmp.ne.s32.totalorder %s62, %s63
      %p74 = scmp.eq.s32.totalorder %s19, 0
      %p75 = por %p73, %p74
      %p76 = scmp.ne.s32.totalorder %s62, %s63
      %p77 = scmp.eq.s32.totalorder %s20, 1
      %p78 = por %p76, %p77
      %p80 = scmp.ne.s32.totalorder %s63, %s79
      %p81 = scmp.eq.s32.totalorder %s20, 0
      %p82 = por %p80, %p81
      %s83 = ssub.s32 %s21, %s33
      %s84 = ssub.s32 %s22, %s29
      %s85 = sor.u32 %s83, %s84
      %p86 = scmp.eq.s32.totalorder %s85, 0
      %s88 = sadd.s32 %s87, 1
      %s89 = scalar_select %p86, %s87, %s88
      %p92 = pneg %p86
      %p93 = scmp.eq.s32.totalorder %s14, 1
      %p94 = por %p92, %p93
      %p95 = scmp.ne.s32.totalorder %s87, %s90
      %p96 = scmp.eq.s32.totalorder %s14, 0
      %p97 = por %p95, %p96
      %p98 = scmp.ne.s32.totalorder %s87, %s90
      %p99 = scmp.eq.s32.totalorder %s19, 1
      %p100 = por %p98, %p99
      %p101 = scmp.ne.s32.totalorder %s90, %s91
      %p102 = scmp.eq.s32.totalorder %s19, 0
      %p103 = por %p101, %p102
      %p104 = scmp.ne.s32.totalorder %s90, %s91
      %p105 = scmp.eq.s32.totalorder %s20, 1
      %p106 = por %p104, %p105
      %p108 = scmp.ne.s32.totalorder %s91, %s107
      %p109 = scmp.eq.s32.totalorder %s20, 0
      %p110 = por %p108, %p109
      %p111 = scmp.le.s32.totalorder 1, %s14
      %p112 = scmp.lt.s32.totalorder %s14, 3
      %p113 = pnand %p111, %p112
      %p114 = pneg %p113
      // Predicated region
      $region9: #{tpu_custom_call.1} parent=5 // pred_check
        _
      $region10: #{tpu_custom_call.1} parent=5 // pred_check_branch
        %116 = sbr.rel (%p113) target = $region12
      $region11: #{tpu_custom_call.1} parent=5 // pred_region
        %s117 = ssub.s32 %s14, 1
        // Predicated region
        $region13: #{tpu_custom_call.1} parent=11 // pred_check
          %p118 = pneg %p47
        $region14: #{tpu_custom_call.1} parent=11 // pred_check_branch
          %120 = sbr.rel (%p118) target = $region16
        $region15: #{tpu_custom_call.1} parent=11 // pred_region
          _
        $region16: #{tpu_custom_call.1} parent=11 // pred_fallthru
          _
      $region12: #{tpu_custom_call.1} parent=5 // pred_fallthru
        _
      %p121 = scmp.lt.s32.totalorder %s14, 2
      // Predicated region
      $region17: #{tpu_custom_call.1} parent=5 // pred_check
        %p122 = pneg %p121
      $region18: #{tpu_custom_call.1} parent=5 // pred_check_branch
        %124 = sbr.rel (%p122) target = $region20
      $region19: #{tpu_custom_call.1} parent=5 // pred_region
        // Predicated region
        $region21: #{tpu_custom_call.1} parent=19 // pred_check
          %p125 = pneg %p69
        $region22: #{tpu_custom_call.1} parent=19 // pred_check_branch
          %127 = sbr.rel (%p125) target = $region24
        $region23: #{tpu_custom_call.1} parent=19 // pred_region
          %s128 = sand.u32 %s59, 1
          %s129 = scalar_lea.sflag [#allocation3], %s128
          %s130 = sand.u32 %s59, 1
          %s131 = smul.addr %s130, 8
          %s132 = scalar_lea.vmem [#allocation2], %s131
          %s133 = smul.u32 2, %s22
          %135 = vsyncadd %s129, 0
          %s136 = smul.addr %s21, 2
          %s137 = sadd.s32 %s133, %s136
          %s138 = smul.addr %s137, 4
          %s139 = scalar_lea.hbm %s1, %s138
          %s141 = sshll.u32 %s139, 4
          %s142 = int_to_ptr.hbm [resolvable:$true] %s141
          %s143 = sshll.u32 %s132, 4
          %s144 = int_to_ptr.vmem [resolvable:$true] %s143
          %146 = dma.hbm_to_vmem [thread:$0]  %s142, 128, %s144, %s129
        $region24: #{tpu_custom_call.1} parent=19 // pred_fallthru
          _
      $region20: #{tpu_custom_call.1} parent=5 // pred_fallthru
        _
      %p147 = scmp.le.s32.totalorder 1, %s14
      %p148 = scmp.lt.s32.totalorder %s14, 3
      %p149 = pnand %p147, %p148
      %p150 = pneg %p149
      // Predicated region
      $region25: #{tpu_custom_call.1} parent=5 // pred_check
        _
      $region26: #{tpu_custom_call.1} parent=5 // pred_check_branch
        %152 = sbr.rel (%p149) target = $region28
      $region27: #{tpu_custom_call.1} parent=5 // pred_region
        %s153 = ssub.s32 %s14, 1
        %s154 = sand.u32 %s62, 1
        %s155 = scalar_lea.sflag [#allocation3], %s154
        %s156 = sand.u32 %s62, 1
        %s157 = smul.addr %s156, 8
        %s158 = scalar_lea.vmem [#allocation2], %s157
        // Predicated region
        $region29: #{tpu_custom_call.1} parent=27 // pred_check
          %p159 = pneg %p75
        $region30: #{tpu_custom_call.1} parent=27 // pred_check_branch
          %161 = sbr.rel (%p159) target = $region32
        $region31: #{tpu_custom_call.1} parent=27 // pred_region
          %163 = dma.done %s155, 128
        $region32: #{tpu_custom_call.1} parent=27 // pred_fallthru
          _
        %p164 = pneg %p47
        %p165 = pneg %p44
        %s166 = sand.u32 %s62, 1
        %s167 = scalar_lea.sflag [#allocation3], %s166
        %s168 = sand.u32 %s62, 1
        %s169 = smul.addr %s168, 8
        %s170 = scalar_lea.vmem [#allocation2], %s169
        %p171 = pneg %p75
        %p172 = pneg %p72
        %p173 = pneg %p103
        %p174 = pneg %p100
        %s175 = sand.u32 %s90, 1
        %s176 = scalar_lea.sflag [#allocation4], %s175
        %s177 = sand.u32 %s90, 1
        %s178 = smul.addr %s177, 16
        %s179 = scalar_lea.vmem [#allocation5], %s178
        %s180 = smul.u32 2, %s24
        %s181 = smul.u32 2, %s24
        %v182 = vld [vmem:[%s0] sm:$0xff]
        %v183 = vld [vmem:[%s158] sm:$0xff]
        %185 = vst [vmem:[#allocation1] ss:$2 sm:$0xff] %v183
        %v186 = vld.sshfl [vmem:[#allocation1] sm:$0xff pattern:$0x75316420]
        %v187 = vld.sshfl [vmem:[#allocation1 + $0x8] sm:$0xff pattern:$0x75316420]
        %vm188 = vcmask 31744
        %v190 = vsel %vm188, %v182, 0
        %vm192 = vcmask 1043456
        %v193 = vsel %vm192, %v186, 0
        %v195 = vsel %vm192, %v187, 0
        %197 = vmatpush.msra.mxu0 0.0
        %198 = vmatpush.msra.mxu0 0.0
        %199 = vmatpush.msra.mxu0 0.0
        %200 = vmatpush.msra.mxu0 0.0
        %201 = vmatpush.msra.mxu0 0.0
        %202 = vmatpush.msra.mxu0 0.0
        %203 = vmatpush.msra.mxu0 0.0
        %204 = vmatpush.msra.mxu0 0.0
        %205 = vmatpush.msra.mxu0 0.0
        %206 = vmatpush.msra.mxu0 0.0
        %207 = vmatpush.msra.mxu0 0.0
        %208 = vmatpush.msra.mxu0 0.0
        %209 = vmatpush.msra.mxu0 0.0
        %210 = vmatpush.msra.mxu0 0.0
        %211 = vmatpush.msra.mxu0 0.0
        %212 = vmatpush.msra.mxu0 %v193
        %213 = vmatmul.f32.gmra.mxu0 %v190
        %v214 = vpop.f32.mrf.mxu0
        %v215 = vadd.f32 0.0, %v214
        %216 = vdwg.mxu0
        %217 = vmatpush.msra.mxu0 0.0
        %218 = vmatpush.msra.mxu0 0.0
        %219 = vmatpush.msra.mxu0 0.0
        %220 = vmatpush.msra.mxu0 0.0
        %221 = vmatpush.msra.mxu0 0.0
        %222 = vmatpush.msra.mxu0 0.0
        %223 = vmatpush.msra.mxu0 0.0
        %224 = vmatpush.msra.mxu0 0.0
        %225 = vmatpush.msra.mxu0 0.0
        %226 = vmatpush.msra.mxu0 0.0
        %227 = vmatpush.msra.mxu0 0.0
        %228 = vmatpush.msra.mxu0 0.0
        %229 = vmatpush.msra.mxu0 0.0
        %230 = vmatpush.msra.mxu0 0.0
        %231 = vmatpush.msra.mxu0 0.0
        %232 = vmatpush.msra.mxu0 %v195
        %233 = vmatmul.f32.gmra.mxu0 %v190
        %v234 = vpop.f32.mrf.mxu0
        %v235 = vadd.f32 0.0, %v234
        %236 = vdwg.mxu0
        %237 = vst [vmem:[%s179] sm:$0xff] %v215
        %238 = vst [vmem:[%s179 + $0x8] sm:$0xff] %v235
        %s239 = sand.u32 %s90, 1
        %s240 = scalar_lea.sflag [#allocation4], %s239
        %s241 = sand.u32 %s90, 1
        %s242 = smul.addr %s241, 16
        %s243 = scalar_lea.vmem [#allocation5], %s242
        // Predicated region
        $region33: #{tpu_custom_call.1} parent=27 // pred_check
          %p244 = pneg %p100
        $region34: #{tpu_custom_call.1} parent=27 // pred_check_branch
          %246 = sbr.rel (%p244) target = $region36
        $region35: #{tpu_custom_call.1} parent=27 // pred_region
          %s247 = smul.u32 2, %s24
          %249 = vsyncadd %s240, 0
          %s250 = smul.addr %s23, 2
          %s251 = sadd.s32 %s247, %s250
          %s252 = smul.addr %s251, 8
          %s253 = scalar_lea.hbm %s2, %s252
          %s255 = sshll.u32 %s243, 4
          %s256 = int_to_ptr.vmem [resolvable:$true] %s255
          %s257 = sshll.u32 %s253, 4
          %s258 = int_to_ptr.hbm [resolvable:$true] %s257
          %260 = dma.vmem_to_hbm [thread:$0]  %s256, 256, %s258, %s240
        $region36: #{tpu_custom_call.1} parent=27 // pred_fallthru
          _
      $region28: #{tpu_custom_call.1} parent=5 // pred_fallthru
        _
      %p261 = scmp.le.s32.totalorder 2, %s14
      // Predicated region
      $region37: #{tpu_custom_call.1} parent=5 // pred_check
        %p262 = pneg %p261
      $region38: #{tpu_custom_call.1} parent=5 // pred_check_branch
        %264 = sbr.rel (%p262) target = $region40
      $region39: #{tpu_custom_call.1} parent=5 // pred_region
        %s265 = ssub.s32 %s14, 2
        // Predicated region
        $region41: #{tpu_custom_call.1} parent=39 // pred_check
          %p266 = pneg %p106
        $region42: #{tpu_custom_call.1} parent=39 // pred_check_branch
          %268 = sbr.rel (%p266) target = $region44
        $region43: #{tpu_custom_call.1} parent=39 // pred_region
          %s269 = sand.u32 %s91, 1
          %s270 = scalar_lea.sflag [#allocation4], %s269
          %s271 = sand.u32 %s91, 1
          %s272 = smul.addr %s271, 16
          %s273 = scalar_lea.vmem [#allocation5], %s272
          %275 = dma.done %s270, 256
        $region44: #{tpu_custom_call.1} parent=39 // pred_fallthru
          _
      $region40: #{tpu_custom_call.1} parent=5 // pred_fallthru
        _
    $region6: #{tpu_custom_call.1} parent=1 // loop_footer
      %s18 = sadd.s32 1, %s14
    $region7: #{tpu_custom_call.1} parent=1 // loop_footer_branch
      %13 = sbr.rel target = $region3
    $region8: #{tpu_custom_call.1} parent=1 // loop_exit
      _
    %276 = vsyncpa [#allocation3], 1
    %s277 = scalar_lea.sflag [#allocation3], 1
    %278 = vsyncpa %s277, 1
    %279 = vsyncpa [#allocation4], 1
    %s280 = scalar_lea.sflag [#allocation4], 1
    %281 = vsyncpa %s280, 1

</llo_original>
